<compile_context>
chip_gen: v7x
topology: tpu7x:2x2x1
jax: 0.10.0
libtpu: 0.0.40
codegen_flags: <defaults>
</compile_context>

<pallas_src>
import functools

import jax
import jax.numpy as jnp
from jax.experimental import pallas as pl
from jax.experimental.pallas import tpu as pltpu


# ----------------------------- Pallas kernels ------------------------------ #

def _pool_sum_spatial_kernel(x_ref, pool_ref, acc_ref, *, n_chunks, lane_chunk):
    """Streaming spatial sum (spatial-tiled mode).

    x_ref:    (1, C, s_tile) input block.
    pool_ref: (1, C, 1) f32 output block (resident across the spatial axis).
    acc_ref:  (1, C, lane_chunk) f32 VMEM scratch accumulator (VPU adds only).
    """
    s = pl.program_id(2)

    @pl.when(s == 0)
    def _init():
        acc_ref[...] = jnp.zeros_like(acc_ref)

    if n_chunks == 1:
        acc_ref[...] += x_ref[...].astype(jnp.float32)
    else:
        def body(j, carry):
            off = pl.multiple_of(j * lane_chunk, lane_chunk)
            acc_ref[...] += x_ref[:, :, pl.ds(off, lane_chunk)].astype(jnp.float32)
            return carry
        jax.lax.fori_loop(0, n_chunks, body, 0, unroll=True)

    # Single cross-lane (XLU) reduce + writeback, once per (batch, half).
    @pl.when(s == pl.num_programs(2) - 1)
    def _finalize():
        red = jnp.sum(acc_ref[...], axis=-1, keepdims=True)    # (1, C, 1)
        pool_ref[...] = red.reshape(pool_ref.shape)


def _pool_sum_channel_kernel(x_ref, pool_ref):
    """Spatial sum (channel-tiled fallback). x_ref: (1, c_tile, HW)."""
    pool_ref[...] = jnp.sum(x_ref[...], axis=-1, keepdims=True, dtype=jnp.float32)


def _broadcast_kernel(y_ref, out_ref):
    """Lane-dense broadcast of the per-channel gate over the spatial block."""
    out_ref[...] = jnp.broadcast_to(y_ref[...], out_ref.shape).astype(out_ref.dtype)


# ------------------------------ Tiling plan --------------------------------- #

_TARGET_BLOCK_BYTES = 2 * 1024 * 1024     # ~2 MiB per streamed block


def _plan_tiles(C, HW, itemsize, target_bytes=_TARGET_BLOCK_BYTES):
    """Pick ("spatial", s_tile) or ("channel", c_tile) by a per-block byte budget."""
    # Whole spatial extent fits one block -> single block per batch (any HW).
    if C * HW * itemsize <= target_bytes:
        return "spatial", HW
    if HW % 128 == 0:
        budget = max(128, ((target_bytes // (C * itemsize)) // 128) * 128)
        t = min(budget, HW)
        t -= t % 128
        while t >= 128:
            if HW % t == 0:
                return "spatial", t
            t -= 128
        return "spatial", 128           # unreachable since HW % 128 == 0
    # HW not 128-aligned and too big for one block: tile the channel axis,
    # keep the full (lane-dense) spatial extent as the last block dim.
    if C % 8 == 0:
        budget = max(8, ((target_bytes // (HW * itemsize)) // 8) * 8)
        t = min(budget, C)
        t -= t % 8
        while t >= 8:
            if C % t == 0:
                return "channel", t
            t -= 8
    return "channel", C


def _vmem_limit_bytes(*buffer_bytes):
    """Explicit scoped-VMEM limit: double-buffered blocks + slack, v7x-safe."""
    need = 2 * sum(int(b) for b in buffer_bytes) + (4 << 20)
    return int(min(48 << 20, max(16 << 20, need)))


# ------------------------------- Wrapper ----------------------------------- #

@jax.jit
def channel_gate(x, params):
    """x: (B, C, H, W) NCHW. Returns the gate expanded to (B, C, H, W)."""
    B, C, H, W = x.shape
    # avg_pool2d(H, stride=H) == full-spatial mean only for square inputs.
    assert H == W, "ChannelGate assumes square spatial dims (H == W)"
    HW = H * W
    itemsize = jnp.dtype(x.dtype).itemsize
    x_flat = x.reshape(B, C, HW)

    mode, tile = _plan_tiles(C, HW, itemsize)

    # ---- Pass 1: tiled global spatial sum (mean folded into the MLP below) ----
    if mode == "spatial":
        s_tile = tile
        n_s = HW // s_tile
        lane_chunk = 128 if s_tile % 128 == 0 else s_tile
        n_chunks = s_tile // lane_chunk
        # Two parallel spatial halves -> v7x megacore coverage even when B == 1.
        n_par = 2 if (n_s >= 2 and n_s % 2 == 0) else 1
        n_s_in = n_s // n_par

        kernel = functools.partial(_pool_sum_spatial_kernel,
                                   n_chunks=n_chunks, lane_chunk=lane_chunk)
        in_block = C * s_tile * itemsize
        scratch_b = C * lane_chunk * 4
        pooled_parts = pl.pallas_call(
            kernel,
            out_shape=jax.ShapeDtypeStruct((B * n_par, C, 1), jnp.float32),
            grid=(B, n_par, n_s_in),
            in_specs=[pl.BlockSpec((1, C, s_tile),
                                   lambda b, h, s: (b, 0, h * n_s_in + s))],
            out_specs=pl.BlockSpec((1, C, 1),
                                   lambda b, h, s: (b * n_par + h, 0, 0)),
            scratch_shapes=[pltpu.VMEM((1, C, lane_chunk), jnp.float32)],
            compiler_params=pltpu.CompilerParams(
                dimension_semantics=("parallel", "parallel", "arbitrary"),
                vmem_limit_bytes=_vmem_limit_bytes(in_block, C * 4, scratch_b)),
        )(x_flat)
        pooled_sum = pooled_parts.reshape(B, n_par, C).sum(axis=1)      # (B, C)
    else:
        c_tile = tile
        n_c = C // c_tile
        in_block = c_tile * HW * itemsize
        pooled3 = pl.pallas_call(
            _pool_sum_channel_kernel,
            out_shape=jax.ShapeDtypeStruct((B, C, 1), jnp.float32),
            grid=(B, n_c),
            in_specs=[pl.BlockSpec((1, c_tile, HW), lambda b, c: (b, c, 0))],
            out_specs=pl.BlockSpec((1, c_tile, 1), lambda b, c: (b, c, 0)),
            compiler_params=pltpu.CompilerParams(
                dimension_semantics=("parallel", "parallel"),
                vmem_limit_bytes=_vmem_limit_bytes(in_block, c_tile * 4)),
        )(x_flat)
        pooled_sum = pooled3[:, :, 0]                                   # (B, C)

    # ---- Tiny MLP in plain JAX (sub-MXU-tile GEMMs are pure latency in-kernel).
    # Fold eval-mode BatchNorm1d AND the 1/HW mean scale into the first Linear.
    w1, b1, gamma, beta, rmean, rvar, w2, b2 = params
    scale = gamma * jax.lax.rsqrt(rvar + 1e-5)            # (1, Cr)
    w1f = w1 * (scale * (1.0 / HW))                       # (C, Cr): BN scale + mean
    b1f = (b1 - rmean) * scale + beta                     # (1, Cr)
    h = jnp.maximum(pooled_sum @ w1f + b1f, 0.0)          # (B, Cr)
    y = (h @ w2 + b2).astype(x.dtype)                     # (B, C)
    y3 = y[:, :, None]                                    # (B, C, 1)

    # ---- Pass 2: tiled lane-dense broadcast of the gate over spatial dims ----
    if mode == "spatial":
        out_block = C * s_tile * itemsize
        out = pl.pallas_call(
            _broadcast_kernel,
            out_shape=jax.ShapeDtypeStruct((B, C, HW), x.dtype),
            grid=(B, n_s),
            in_specs=[pl.BlockSpec((1, C, 1), lambda b, s: (b, 0, 0))],
            out_specs=pl.BlockSpec((1, C, s_tile), lambda b, s: (b, 0, s)),
            compiler_params=pltpu.CompilerParams(
                dimension_semantics=("parallel", "parallel"),
                vmem_limit_bytes=_vmem_limit_bytes(C * itemsize, out_block)),
        )(y3)
    else:
        out_block = c_tile * HW * itemsize
        out = pl.pallas_call(
            _broadcast_kernel,
            out_shape=jax.ShapeDtypeStruct((B, C, HW), x.dtype),
            grid=(B, n_c),
            in_specs=[pl.BlockSpec((1, c_tile, 1), lambda b, c: (b, c, 0))],
            out_specs=pl.BlockSpec((1, c_tile, HW), lambda b, c: (b, c, 0)),
            compiler_params=pltpu.CompilerParams(
                dimension_semantics=("parallel", "parallel"),
                vmem_limit_bytes=_vmem_limit_bytes(c_tile * itemsize, out_block)),
        )(y3)
    return out.reshape(B, C, H, W)


# ------------------------ Params & pure-JAX reference ---------------------- #

def init_params(key, gate_channel, reduction_ratio=16):
    """Deterministic synthetic params (PyTorch-style init + non-trivial BN stats)."""
    c = gate_channel
    cr = gate_channel // reduction_ratio
    k1, k2, k3, k4, k5, k6, k7, k8 = jax.random.split(key, 8)
    bound1 = 1.0 / jnp.sqrt(c)
    bound2 = 1.0 / jnp.sqrt(cr)
    w1 = jax.random.uniform(k1, (c, cr), jnp.float32, -bound1, bound1)   # (in, out)
    b1 = jax.random.uniform(k2, (1, cr), jnp.float32, -bound1, bound1)
    w2 = jax.random.uniform(k3, (cr, c), jnp.float32, -bound2, bound2)
    b2 = jax.random.uniform(k4, (1, c), jnp.float32, -bound2, bound2)
    gamma = jax.random.uniform(k5, (1, cr), jnp.float32, 0.5, 1.5)
    beta = 0.1 * jax.random.normal(k6, (1, cr), jnp.float32)
    rmean = 0.1 * jax.random.normal(k7, (1, cr), jnp.float32)
    rvar = jax.random.uniform(k8, (1, cr), jnp.float32, 0.5, 1.5)
    return (w1, b1, gamma, beta, rmean, rvar, w2, b2)


def channel_gate_ref(x, params):
    """Pure-JAX reference (matches PyTorch eval-mode forward)."""
    w1, b1, gamma, beta, rmean, rvar, w2, b2 = params
    B, C, H, W = x.shape
    pooled = jnp.mean(x.reshape(B, C, H * W), axis=-1)
    h = pooled @ w1 + b1
    h = (h - rmean) * jax.lax.rsqrt(rvar + 1e-5) * gamma + beta
    h = jnp.maximum(h, 0.0)
    y = h @ w2 + b2
    return jnp.broadcast_to(y[:, :, None, None], x.shape)


if __name__ == "__main__":
    B, C, H, W = 2, 64, 16, 16          # gate_channel=64, reduction_ratio=16 -> hidden=4
    key = jax.random.PRNGKey(0)
    kx, kp = jax.random.split(key)
    x = jax.random.normal(kx, (B, C, H, W), dtype=jnp.float32)
    params = init_params(kp, C, reduction_ratio=16)

    out = channel_gate(x, params)
    out = jax.block_until_ready(out)

    ref = channel_gate_ref(x, params)
    assert out.shape == (B, C, H, W)
    assert jnp.allclose(out, ref, atol=1e-3, rtol=1e-3)
    print("KERNEL_OK")
</pallas_src>

<mosaic_0001>
module attributes {stable_mosaic.version = 11 : i64} {
  func.func @_pool_sum_spatial_kernel(%arg0: i32, %arg1: i32, %arg2: i32, %arg3: memref<1x64x256xf32, #tpu.memory_space<vmem>>, %arg4: memref<1x64x1xf32, #tpu.memory_space<vmem>>, %arg5: memref<1x64x128xf32, #tpu.memory_space<vmem>>) attributes {dimension_semantics = [#tpu.dimension_semantics<parallel>, #tpu.dimension_semantics<parallel>, #tpu.dimension_semantics<arbitrary>], iteration_bounds = array<i64: 2, 1, 1>, scalar_prefetch = 0 : i64, scratch_operands = 1 : i64, tpu.core_type = #tpu.core_type<tc>, window_params = [{transform_indices = @transform_0, window_bounds = array<i64: 1, 64, 256>}, {transform_indices = @transform_1, window_bounds = array<i64: 1, 64, 1>}]} {
    %c0_i32 = arith.constant 0 : i32
    %0 = arith.cmpi eq, %arg2, %c0_i32 : i32
    %1 = arith.extui %0 : i1 to i32
    %c0_i32_0 = arith.constant 0 : i32
    %2 = arith.cmpi ne, %1, %c0_i32_0 : i32
    scf.if %2 {
      %cst = arith.constant 0.000000e+00 : f32
      %20 = vector.broadcast %cst : f32 to vector<1x64x128xf32>
      %c0_20 = arith.constant 0 : index
      %c0_21 = arith.constant 0 : index
      %c0_22 = arith.constant 0 : index
      %21 = vector.load %arg5[%c0_20, %c0_21, %c0_22] : memref<1x64x128xf32, #tpu.memory_space<vmem>>, vector<1x64x128xf32>
      tpu.vector_store %arg5[%c0_20, %c0_21, %c0_22], %20 {strides = array<i32>} : memref<1x64x128xf32, #tpu.memory_space<vmem>>, vector<1x64x128xf32>,
    } else {
    }
    %c0_i32_1 = arith.constant 0 : i32
    %c128_i32 = arith.constant 128 : i32
    %3 = arith.muli %c0_i32_1, %c128_i32 : i32
    %4 = tpu.assume_multiple %3, 128 : i32
    %c0 = arith.constant 0 : index
    %c0_2 = arith.constant 0 : index
    %c0_3 = arith.constant 0 : index
    %5 = vector.load %arg5[%c0, %c0_2, %c0_3] : memref<1x64x128xf32, #tpu.memory_space<vmem>>, vector<1x64x128xf32>
    %c0_4 = arith.constant 0 : index
    %c0_5 = arith.constant 0 : index
    %6 = arith.index_cast %4 : i32 to index
    %7 = vector.load %arg3[%c0_4, %c0_5, %6] : memref<1x64x256xf32, #tpu.memory_space<vmem>>, vector<1x64x128xf32>
    %8 = arith.addf %5, %7 : vector<1x64x128xf32>
    %c0_6 = arith.constant 0 : index
    %c0_7 = arith.constant 0 : index
    %c0_8 = arith.constant 0 : index
    %9 = vector.load %arg5[%c0_6, %c0_7, %c0_8] : memref<1x64x128xf32, #tpu.memory_space<vmem>>, vector<1x64x128xf32>
    tpu.vector_store %arg5[%c0_6, %c0_7, %c0_8], %8 {strides = array<i32>} : memref<1x64x128xf32, #tpu.memory_space<vmem>>, vector<1x64x128xf32>,
    %c1_i32 = arith.constant 1 : i32
    %c128_i32_9 = arith.constant 128 : i32
    %10 = arith.muli %c1_i32, %c128_i32_9 : i32
    %11 = tpu.assume_multiple %10, 128 : i32
    %c0_10 = arith.constant 0 : index
    %c0_11 = arith.constant 0 : index
    %c0_12 = arith.constant 0 : index
    %12 = vector.load %arg5[%c0_10, %c0_11, %c0_12] : memref<1x64x128xf32, #tpu.memory_space<vmem>>, vector<1x64x128xf32>
    %c0_13 = arith.constant 0 : index
    %c0_14 = arith.constant 0 : index
    %13 = arith.index_cast %11 : i32 to index
    %14 = vector.load %arg3[%c0_13, %c0_14, %13] : memref<1x64x256xf32, #tpu.memory_space<vmem>>, vector<1x64x128xf32>
    %15 = arith.addf %12, %14 : vector<1x64x128xf32>
    %c0_15 = arith.constant 0 : index
    %c0_16 = arith.constant 0 : index
    %c0_17 = arith.constant 0 : index
    %16 = vector.load %arg5[%c0_15, %c0_16, %c0_17] : memref<1x64x128xf32, #tpu.memory_space<vmem>>, vector<1x64x128xf32>
    tpu.vector_store %arg5[%c0_15, %c0_16, %c0_17], %15 {strides = array<i32>} : memref<1x64x128xf32, #tpu.memory_space<vmem>>, vector<1x64x128xf32>,
    %c2_i32 = arith.constant 2 : i32
    %c0_i32_18 = arith.constant 0 : i32
    %17 = arith.cmpi eq, %arg2, %c0_i32_18 : i32
    %18 = arith.extui %17 : i1 to i32
    %c0_i32_19 = arith.constant 0 : i32
    %19 = arith.cmpi ne, %18, %c0_i32_19 : i32
    scf.if %19 {
      %c0_20 = arith.constant 0 : index
      %c0_21 = arith.constant 0 : index
      %c0_22 = arith.constant 0 : index
      %20 = vector.load %arg5[%c0_20, %c0_21, %c0_22] : memref<1x64x128xf32, #tpu.memory_space<vmem>>, vector<1x64x128xf32>
      %cst = arith.constant dense<0.000000e+00> : vector<1x64xf32>
      %21 = vector.multi_reduction <add>, %20, %cst [2] : vector<1x64x128xf32> to vector<1x64xf32>
      %22 = vector.shape_cast %21 : vector<1x64xf32> to vector<1x64x1xf32>
      %c0_23 = arith.constant 0 : index
      %c0_24 = arith.constant 0 : index
      %c0_25 = arith.constant 0 : index
      %23 = vector.load %arg4[%c0_23, %c0_24, %c0_25] : memref<1x64x1xf32, #tpu.memory_space<vmem>>, vector<1x64x1xf32>
      tpu.vector_store %arg4[%c0_23, %c0_24, %c0_25], %22 {strides = array<i32>} : memref<1x64x1xf32, #tpu.memory_space<vmem>>, vector<1x64x1xf32>,
    } else {
    }
    return
  }
  func.func @transform_0(%arg0: i32, %arg1: i32, %arg2: i32) -> (i32, i32, i32) {
    %c1_i32 = arith.constant 1 : i32
    %0 = arith.muli %arg1, %c1_i32 : i32
    %1 = arith.addi %0, %arg2 : i32
    %c0_i32 = arith.constant 0 : i32
    %c0_i32_0 = arith.constant 0 : i32
    return %arg0, %c0_i32, %1 : i32, i32, i32
  }
  func.func @transform_1(%arg0: i32, %arg1: i32, %arg2: i32) -> (i32, i32, i32) {
    %c1_i32 = arith.constant 1 : i32
    %0 = arith.muli %arg0, %c1_i32 : i32
    %1 = arith.addi %0, %arg1 : i32
    %c0_i32 = arith.constant 0 : i32
    %c0_i32_0 = arith.constant 0 : i32
    %c0_i32_1 = arith.constant 0 : i32
    return %1, %c0_i32, %c0_i32_0 : i32, i32, i32
  }
}

module attributes {stable_mosaic.version = 11 : i64} {
  func.func @_broadcast_kernel(%arg0: i32, %arg1: i32, %arg2: memref<1x64x1xf32, #tpu.memory_space<vmem>>, %arg3: memref<1x64x256xf32, #tpu.memory_space<vmem>>) attributes {dimension_semantics = [#tpu.dimension_semantics<parallel>, #tpu.dimension_semantics<parallel>], iteration_bounds = array<i64: 2, 1>, scalar_prefetch = 0 : i64, scratch_operands = 0 : i64, tpu.core_type = #tpu.core_type<tc>, window_params = [{transform_indices = @transform_0, window_bounds = array<i64: 1, 64, 1>}, {transform_indices = @transform_1, window_bounds = array<i64: 1, 64, 256>}]} {
    %c0 = arith.constant 0 : index
    %c0_0 = arith.constant 0 : index
    %c0_1 = arith.constant 0 : index
    %0 = vector.load %arg2[%c0, %c0_0, %c0_1] : memref<1x64x1xf32, #tpu.memory_space<vmem>>, vector<1x64x1xf32>
    %1 = vector.shape_cast %0 : vector<1x64x1xf32> to vector<1x64x1xf32>
    %2 = vector.broadcast %1 : vector<1x64x1xf32> to vector<1x64x256xf32>
    %c0_2 = arith.constant 0 : index
    %c0_3 = arith.constant 0 : index
    %c0_4 = arith.constant 0 : index
    %3 = vector.load %arg3[%c0_2, %c0_3, %c0_4] : memref<1x64x256xf32, #tpu.memory_space<vmem>>, vector<1x64x256xf32>
    tpu.vector_store %arg3[%c0_2, %c0_3, %c0_4], %2 {strides = array<i32>} : memref<1x64x256xf32, #tpu.memory_space<vmem>>, vector<1x64x256xf32>,
    return
  }
  func.func @transform_0(%arg0: i32, %arg1: i32) -> (i32, i32, i32) {
    %c0_i32 = arith.constant 0 : i32
    %c0_i32_0 = arith.constant 0 : i32
    %c0_i32_1 = arith.constant 0 : i32
    return %arg0, %c0_i32, %c0_i32_0 : i32, i32, i32
  }
  func.func @transform_1(%arg0: i32, %arg1: i32) -> (i32, i32, i32) {
    %c0_i32 = arith.constant 0 : i32
    %c0_i32_0 = arith.constant 0 : i32
    return %arg0, %c0_i32, %arg1 : i32, i32, i32
  }
}

</mosaic_0001>

<llo_original>
// kernel: channel_gate.2
$region0: #{channel_gate.2}
  #allocation0 [shape = 'u32[]', space=smem, size = 0x4, offset = 0x4, fixed_abs, tag = 'smem constant byte address 0x4 - core index']
  #allocation1 [shape = 'u32[144,128]{1,0:T(1,128)}', space=vmem, size = 0x12000, scoped, tag = 'internal scratch']
  #allocation2 [shape = 'f32[1,64,128]{2,1,0:T(8,128)}', space=vmem, size = 0x8000, scoped, tag = 'scratch operand']
  %s0 = inlined_call_operand.vmem [shape: f32[2,64,256], index: 0, kind: input, shape index: {}]
  %s1 = inlined_call_operand.vmem [shape: f32[2,64,1], index: 1, kind: output, shape index: {}]
  %s2 = sld [smem:[#allocation0]]
  $region45: #{channel_gate.2} parent=0
    _
  %s4 = ssub.s32 1, %s2
  %s5 = scalar_select 0, %s4, %s2
  loop: start=0, step=1, limit=4
  $region2: #{channel_gate.2} parent=0 // loop_pre_header
    _
  $region3: #{channel_gate.2} parent=0 // loop_header
    %s7 = sphi 0, %s11
    %p8 = scmp.ge.s32.totalorder %s7, 4
    %s14 = sphi 0, %s33
    %s15 = sphi 0, %s29
    %s16 = sphi 0, %s25
    %s17 = sphi 0, %s14
    %s18 = sphi 0, %s15
    %s19 = sphi 0, %s16
    %s20 = sphi 0, %s17
    %s21 = sphi 0, %s18
    %s22 = sphi 0, %s19
    %s40 = sphi 0, %s42
    %s43 = sphi 0, %s40
    %s44 = sphi 0, %s43
    %s60 = sphi 0, %s44
    %s68 = sphi 0, %s70
    %s71 = sphi 0, %s68
    %s72 = sphi 0, %s71
    %s88 = sphi 0, %s72
  $region4: #{channel_gate.2} parent=0 // loop_header_branch
    %10 = sbr.rel (%p8) target = $region8
  $region5: #{channel_gate.2} parent=0 // loop_body
    %s12 = ssub.s32 %s7, 1
    %s13 = ssub.s32 %s7, 2
    %s23 = sadd.s32 1, %s16
    %p24 = scmp.ge.s32.totalorder %s23, 1
    %s25 = scalar_select %p24, 0, %s23
    %s26 = sadd.s32 1, %s15
    %s27 = scalar_select %p24, %s26, %s15
    %p28 = scmp.ge.s32.totalorder %s27, 1
    %s29 = scalar_select %p28, 0, %s27
    %s30 = sadd.s32 1, %s14
    %s31 = scalar_select %p28, %s30, %s14
    %p32 = scmp.ge.s32.totalorder %s31, 2
    %s33 = scalar_select %p32, 0, %s31
    %s34 = sadd.s32 %s15, %s16
    %s35 = sadd.s32 %s29, %s25
    %s36 = ssub.s32 %s14, %s33
    %s37 = ssub.s32 %s34, %s35
    %s38 = sor.u32 %s36, %s37
    %p39 = scmp.eq.s32.totalorder %s38, 0
    %s41 = sadd.s32 %s40, 1
    %s42 = scalar_select %p39, %s40, %s41
    %p45 = pneg %p39
    %p46 = scmp.eq.s32.totalorder %s7, 1
    %p47 = por %p45, %p46
    %p48 = scmp.ne.s32.totalorder %s40, %s43
    %p49 = scmp.eq.s32.totalorder %s7, 0
    %p50 = por %p48, %p49
    %p51 = scmp.ne.s32.totalorder %s40, %s43
    %p52 = scmp.eq.s32.totalorder %s12, 1
    %p53 = por %p51, %p52
    %p54 = scmp.ne.s32.totalorder %s43, %s44
    %p55 = scmp.eq.s32.totalorder %s12, 0
    %p56 = por %p54, %p55
    %p57 = scmp.ne.s32.totalorder %s43, %s44
    %p58 = scmp.eq.s32.totalorder %s13, 1
    %p59 = por %p57, %p58
    %p61 = scmp.ne.s32.totalorder %s44, %s60
    %p62 = scmp.eq.s32.totalorder %s13, 0
    %p63 = por %p61, %p62
    %s64 = sadd.s32 %s14, %s15
    %s65 = sadd.s32 %s33, %s29
    %s66 = ssub.s32 %s64, %s65
    %p67 = scmp.eq.s32.totalorder %s66, 0
    %s69 = sadd.s32 %s68, 1
    %s70 = scalar_select %p67, %s68, %s69
    %p73 = pneg %p67
    %p74 = scmp.eq.s32.totalorder %s7, 1
    %p75 = por %p73, %p74
    %p76 = scmp.ne.s32.totalorder %s68, %s71
    %p77 = scmp.eq.s32.totalorder %s7, 0
    %p78 = por %p76, %p77
    %p79 = scmp.ne.s32.totalorder %s68, %s71
    %p80 = scmp.eq.s32.totalorder %s12, 1
    %p81 = por %p79, %p80
    %p82 = scmp.ne.s32.totalorder %s71, %s72
    %p83 = scmp.eq.s32.totalorder %s12, 0
    %p84 = por %p82, %p83
    %p85 = scmp.ne.s32.totalorder %s71, %s72
    %p86 = scmp.eq.s32.totalorder %s13, 1
    %p87 = por %p85, %p86
    %p89 = scmp.ne.s32.totalorder %s72, %s88
    %p90 = scmp.eq.s32.totalorder %s13, 0
    %p91 = por %p89, %p90
    %p92 = scmp.le.s32.totalorder 1, %s7
    %p93 = scmp.lt.s32.totalorder %s7, 3
    %p94 = pnand %p92, %p93
    %p95 = pneg %p94
    // Predicated region
    $region9: #{channel_gate.2} parent=5 // pred_check
      _
    $region10: #{channel_gate.2} parent=5 // pred_check_branch
      %97 = sbr.rel (%p94) target = $region12
    $region11: #{channel_gate.2} parent=5 // pred_region
      %s98 = ssub.s32 %s7, 1
    $region12: #{channel_gate.2} parent=5 // pred_fallthru
      _
    %p99 = scmp.lt.s32.totalorder %s7, 2
    // Predicated region
    $region13: #{channel_gate.2} parent=5 // pred_check
      %p100 = pneg %p99
    $region14: #{channel_gate.2} parent=5 // pred_check_branch
      %102 = sbr.rel (%p100) target = $region16
    $region15: #{channel_gate.2} parent=5 // pred_region
      // Predicated region
      $region17: #{channel_gate.2} parent=15 // pred_check
        %p103 = pneg %p50
      $region18: #{channel_gate.2} parent=15 // pred_check_branch
        %105 = sbr.rel (%p103) target = $region20
      $region19: #{channel_gate.2} parent=15 // pred_region
        %s106 = sadd.s32 %s15, %s16
        %s107 = smul.u32 2, %s106
        %p108 = scmp.lt.s32.totalorder %s14, 1
        %s109 = scalar_select %p108, %s14, 1
        %p110 = scmp.lt.s32.totalorder %s107, 1
        %s111 = scalar_select %p110, %s107, 1
        %s112 = smul.addr %s109, 16
        %s113 = sadd.s32 %s111, %s112
        %s114 = smul.addr %s113, 8
        %s115 = scalar_lea.vmem %s0, %s114
        %s116 = sadd.s32 %s15, %s16
        %s117 = smul.u32 2, %s116
      $region20: #{channel_gate.2} parent=15 // pred_fallthru
        _
    $region16: #{channel_gate.2} parent=5 // pred_fallthru
      _
    %p118 = scmp.le.s32.totalorder 1, %s7
    %p119 = scmp.lt.s32.totalorder %s7, 3
    %p120 = pnand %p118, %p119
    %p121 = pneg %p120
    // Predicated region
    $region21: #{channel_gate.2} parent=5 // pred_check
      _
    $region22: #{channel_gate.2} parent=5 // pred_check_branch
      %123 = sbr.rel (%p120) target = $region24
    $region23: #{channel_gate.2} parent=5 // pred_region
      %s124 = ssub.s32 %s7, 1
      %s125 = sadd.s32 %s18, %s19
      %s126 = smul.u32 2, %s125
      %p127 = scmp.lt.s32.totalorder %s17, 1
      %s128 = scalar_select %p127, %s17, 1
      %p129 = scmp.lt.s32.totalorder %s126, 1
      %s130 = scalar_select %p129, %s126, 1
      %s131 = smul.addr %s128, 16
      %s132 = sadd.s32 %s130, %s131
      %s133 = smul.addr %s132, 8
      %s134 = scalar_lea.vmem %s0, %s133
      %p135 = pneg %p56
      %p136 = pneg %p53
      %p137 = pneg %p84
      %p138 = pneg %p81
      %s139 = sadd.s32 %s17, %s18
      %p140 = scmp.lt.s32.totalorder %s139, 1
      %s141 = scalar_select %p140, %s139, 1
      %s142 = smul.addr %s141, 8
      %s143 = smul.addr %s142, 8
      %s144 = scalar_lea.vmem %s1, %s143
      %s145 = sadd.s32 %s18, %s19
      %s146 = smul.u32 2, %s145
      %p147 = scmp.lt.s32.totalorder %s17, 1
      %s148 = scalar_select %p147, %s17, 1
      %p149 = scmp.lt.s32.totalorder %s146, 1
      %s150 = scalar_select %p149, %s146, 1
      %s151 = smul.addr %s148, 16
      %s152 = sadd.s32 %s150, %s151
      %s153 = smul.addr %s152, 8
      %s154 = scalar_lea.vmem %s0, %s153
      %s155 = sadd.s32 %s18, %s19
      %s156 = smul.u32 2, %s155
      %s157 = sadd.s32 %s17, %s18
      %p158 = scmp.lt.s32.totalorder %s157, 1
      %s159 = scalar_select %p158, %s157, 1
      %s160 = smul.addr %s159, 8
      %s161 = smul.addr %s160, 8
      %s162 = scalar_lea.vmem %s1, %s161
      %s163 = sadd.s32 %s17, %s18
      %p164 = scmp.eq.s32.totalorder %s19, 0
      // Predicated region
      $region25: #{channel_gate.2} parent=23 // pred_check
        %p165 = pneg %p164
      $region26: #{channel_gate.2} parent=23 // pred_check_branch
        %167 = sbr.rel (%p165) target = $region28
      $region27: #{channel_gate.2} parent=23 // pred_region
        %168 = vst [vmem:[#allocation2] sm:$0xff] 0.0
        %169 = vst [vmem:[#allocation2 + $0x8] sm:$0xff] 0.0
        %170 = vst [vmem:[#allocation2 + $0x10] sm:$0xff] 0.0
        %171 = vst [vmem:[#allocation2 + $0x18] sm:$0xff] 0.0
        %172 = vst [vmem:[#allocation2 + $0x20] sm:$0xff] 0.0
        %173 = vst [vmem:[#allocation2 + $0x28] sm:$0xff] 0.0
        %174 = vst [vmem:[#allocation2 + $0x30] sm:$0xff] 0.0
        %175 = vst [vmem:[#allocation2 + $0x38] sm:$0xff] 0.0
      $region28: #{channel_gate.2} parent=23 // pred_fallthru
        _
      %v176 = vld [vmem:[#allocation2] sm:$0xff]
      %v177 = vld [vmem:[#allocation2 + $0x8] sm:$0xff]
      %v178 = vld [vmem:[#allocation2 + $0x10] sm:$0xff]
      %v179 = vld [vmem:[#allocation2 + $0x18] sm:$0xff]
      %v180 = vld [vmem:[#allocation2 + $0x20] sm:$0xff]
      %v181 = vld [vmem:[#allocation2 + $0x28] sm:$0xff]
      %v182 = vld [vmem:[#allocation2 + $0x30] sm:$0xff]
      %v183 = vld [vmem:[#allocation2 + $0x38] sm:$0xff]
      %v184 = vld [vmem:[%s154] sm:$0xff]
      %v185 = vld [vmem:[%s154 + $0x10] sm:$0xff]
      %v186 = vld [vmem:[%s154 + $0x20] sm:$0xff]
      %v187 = vld [vmem:[%s154 + $0x30] sm:$0xff]
      %v188 = vld [vmem:[%s154 + $0x40] sm:$0xff]
      %v189 = vld [vmem:[%s154 + $0x50] sm:$0xff]
      %v190 = vld [vmem:[%s154 + $0x60] sm:$0xff]
      %v191 = vld [vmem:[%s154 + $0x70] sm:$0xff]
      %v192 = vadd.f32 %v176, %v184
      %v193 = vadd.f32 %v177, %v185
      %v194 = vadd.f32 %v178, %v186
      %v195 = vadd.f32 %v179, %v187
      %v196 = vadd.f32 %v180, %v188
      %v197 = vadd.f32 %v181, %v189
      %v198 = vadd.f32 %v182, %v190
      %v199 = vadd.f32 %v183, %v191
      %200 = vst [vmem:[#allocation2] sm:$0xff] %v192
      %201 = vst [vmem:[#allocation2 + $0x8] sm:$0xff] %v193
      %202 = vst [vmem:[#allocation2 + $0x10] sm:$0xff] %v194
      %203 = vst [vmem:[#allocation2 + $0x18] sm:$0xff] %v195
      %204 = vst [vmem:[#allocation2 + $0x20] sm:$0xff] %v196
      %205 = vst [vmem:[#allocation2 + $0x28] sm:$0xff] %v197
      %206 = vst [vmem:[#allocation2 + $0x30] sm:$0xff] %v198
      %207 = vst [vmem:[#allocation2 + $0x38] sm:$0xff] %v199
      %v208 = vld [vmem:[#allocation2] sm:$0xff]
      %v209 = vld [vmem:[#allocation2 + $0x8] sm:$0xff]
      %v210 = vld [vmem:[#allocation2 + $0x10] sm:$0xff]
      %v211 = vld [vmem:[#allocation2 + $0x18] sm:$0xff]
      %v212 = vld [vmem:[#allocation2 + $0x20] sm:$0xff]
      %v213 = vld [vmem:[#allocation2 + $0x28] sm:$0xff]
      %v214 = vld [vmem:[#allocation2 + $0x30] sm:$0xff]
      %v215 = vld [vmem:[#allocation2 + $0x38] sm:$0xff]
      %s216 = scalar_lea.vmem %s154, 8
      %v217 = vld [vmem:[%s216] sm:$0xff]
      %v218 = vld [vmem:[%s216 + $0x10] sm:$0xff]
      %v219 = vld [vmem:[%s216 + $0x20] sm:$0xff]
      %v220 = vld [vmem:[%s216 + $0x30] sm:$0xff]
      %v221 = vld [vmem:[%s216 + $0x40] sm:$0xff]
      %v222 = vld [vmem:[%s216 + $0x50] sm:$0xff]
      %v223 = vld [vmem:[%s216 + $0x60] sm:$0xff]
      %v224 = vld [vmem:[%s216 + $0x70] sm:$0xff]
      %v225 = vadd.f32 %v208, %v217
      %v226 = vadd.f32 %v209, %v218
      %v227 = vadd.f32 %v210, %v219
      %v228 = vadd.f32 %v211, %v220
      %v229 = vadd.f32 %v212, %v221
      %v230 = vadd.f32 %v213, %v222
      %v231 = vadd.f32 %v214, %v223
      %v232 = vadd.f32 %v215, %v224
      %233 = vst [vmem:[#allocation2] sm:$0xff] %v225
      %234 = vst [vmem:[#allocation2 + $0x8] sm:$0xff] %v226
      %235 = vst [vmem:[#allocation2 + $0x10] sm:$0xff] %v227
      %236 = vst [vmem:[#allocation2 + $0x18] sm:$0xff] %v228
      %237 = vst [vmem:[#allocation2 + $0x20] sm:$0xff] %v229
      %238 = vst [vmem:[#allocation2 + $0x28] sm:$0xff] %v230
      %239 = vst [vmem:[#allocation2 + $0x30] sm:$0xff] %v231
      %240 = vst [vmem:[#allocation2 + $0x38] sm:$0xff] %v232
      // Predicated region
      $region29: #{channel_gate.2} parent=23 // pred_check
        %p241 = pneg %p164
      $region30: #{channel_gate.2} parent=23 // pred_check_branch
        %243 = sbr.rel (%p241) target = $region32
      $region31: #{channel_gate.2} parent=23 // pred_region
        %v244 = vld [vmem:[#allocation2] sm:$0xff]
        %v245 = vld [vmem:[#allocation2 + $0x8] sm:$0xff]
        %v246 = vld [vmem:[#allocation2 + $0x10] sm:$0xff]
        %v247 = vld [vmem:[#allocation2 + $0x18] sm:$0xff]
        %v248 = vld [vmem:[#allocation2 + $0x20] sm:$0xff]
        %v249 = vld [vmem:[#allocation2 + $0x28] sm:$0xff]
        %v250 = vld [vmem:[#allocation2 + $0x30] sm:$0xff]
        %v251 = vld [vmem:[#allocation2 + $0x38] sm:$0xff]
        %252 = vadd.xlane.f32.xlu0 %v244
        %v253 = vpop.xlane.xlu0 %252
        %254 = vadd.xlane.f32.xlu0 %v245
        %v255 = vpop.xlane.xlu0 %254
        %256 = vadd.xlane.f32.xlu0 %v246
        %v257 = vpop.xlane.xlu0 %256
        %258 = vadd.xlane.f32.xlu0 %v247
        %v259 = vpop.xlane.xlu0 %258
        %260 = vadd.xlane.f32.xlu0 %v248
        %v261 = vpop.xlane.xlu0 %260
        %262 = vadd.xlane.f32.xlu0 %v249
        %v263 = vpop.xlane.xlu0 %262
        %264 = vadd.xlane.f32.xlu0 %v250
        %v265 = vpop.xlane.xlu0 %264
        %266 = vadd.xlane.f32.xlu0 %v251
        %v267 = vpop.xlane.xlu0 %266
        %vm268 = vcmask 7168
        %269 = vst.msk [vmem:[%s162] sm:$0xff] %vm268, %v253
        %270 = vst.msk [vmem:[%s162 + $0x8] sm:$0xff] %vm268, %v255
        %271 = vst.msk [vmem:[%s162 + $0x10] sm:$0xff] %vm268, %v257
        %272 = vst.msk [vmem:[%s162 + $0x18] sm:$0xff] %vm268, %v259
        %273 = vst.msk [vmem:[%s162 + $0x20] sm:$0xff] %vm268, %v261
        %274 = vst.msk [vmem:[%s162 + $0x28] sm:$0xff] %vm268, %v263
        %275 = vst.msk [vmem:[%s162 + $0x30] sm:$0xff] %vm268, %v265
        %276 = vst.msk [vmem:[%s162 + $0x38] sm:$0xff] %vm268, %v267
      $region32: #{channel_gate.2} parent=23 // pred_fallthru
        _
      %s277 = sadd.s32 %s17, %s18
      %p278 = scmp.lt.s32.totalorder %s277, 1
      %s279 = scalar_select %p278, %s277, 1
      %s280 = smul.addr %s279, 8
      %s281 = smul.addr %s280, 8
      %s282 = scalar_lea.vmem %s1, %s281
      // Predicated region
      $region33: #{channel_gate.2} parent=23 // pred_check
        %p283 = pneg %p81
      $region34: #{channel_gate.2} parent=23 // pred_check_branch
        %285 = sbr.rel (%p283) target = $region36
      $region35: #{channel_gate.2} parent=23 // pred_region
        %s286 = sadd.s32 %s17, %s18
      $region36: #{channel_gate.2} parent=23 // pred_fallthru
        _
    $region24: #{channel_gate.2} parent=5 // pred_fallthru
      _
    %p287 = scmp.le.s32.totalorder 2, %s7
    // Predicated region
    $region37: #{channel_gate.2} parent=5 // pred_check
      %p288 = pneg %p287
    $region38: #{channel_gate.2} parent=5 // pred_check_branch
      %290 = sbr.rel (%p288) target = $region40
    $region39: #{channel_gate.2} parent=5 // pred_region
      %s291 = ssub.s32 %s7, 2
      // Predicated region
      $region41: #{channel_gate.2} parent=39 // pred_check
        %p292 = pneg %p87
      $region42: #{channel_gate.2} parent=39 // pred_check_branch
        %294 = sbr.rel (%p292) target = $region44
      $region43: #{channel_gate.2} parent=39 // pred_region
        %s295 = sadd.s32 %s20, %s21
        %p296 = scmp.lt.s32.totalorder %s295, 1
        %s297 = scalar_select %p296, %s295, 1
        %s298 = smul.addr %s297, 8
        %s299 = smul.addr %s298, 8
        %s300 = scalar_lea.vmem %s1, %s299
      $region44: #{channel_gate.2} parent=39 // pred_fallthru
        _
    $region40: #{channel_gate.2} parent=5 // pred_fallthru
      _
  $region6: #{channel_gate.2} parent=0 // loop_footer
    %s11 = sadd.s32 1, %s7
  $region7: #{channel_gate.2} parent=0 // loop_footer_branch
    %6 = sbr.rel target = $region3
  $region8: #{channel_gate.2} parent=0 // loop_exit
    _

// kernel: channel_gate.3
$region0: #{channel_gate.3}
  #allocation0 [shape = 'u32[]', space=smem, size = 0x4, offset = 0x4, fixed_abs, tag = 'smem constant byte address 0x4 - core index']
  #allocation1 [shape = 'u32[144,128]{1,0:T(1,128)}', space=vmem, size = 0x12000, scoped, tag = 'internal scratch']
  %s0 = inlined_call_operand.vmem [shape: f32[2,64,1], index: 0, kind: input, shape index: {}]
  %s1 = inlined_call_operand.vmem [shape: f32[2,64,256], index: 1, kind: output, shape index: {}]
  %s2 = sld [smem:[#allocation0]]
  $region37: #{channel_gate.3} parent=0
    _
  %s4 = ssub.s32 1, %s2
  %s5 = scalar_select 0, %s4, %s2
  loop: start=0, step=1, limit=4
  $region2: #{channel_gate.3} parent=0 // loop_pre_header
    _
  $region3: #{channel_gate.3} parent=0 // loop_header
    %s7 = sphi 0, %s11
    %p8 = scmp.ge.s32.totalorder %s7, 4
    %s14 = sphi 0, %s26
    %s15 = sphi 0, %s22
    %s16 = sphi 0, %s14
    %s17 = sphi 0, %s15
    %s18 = sphi 0, %s16
    %s19 = sphi 0, %s17
    %s29 = sphi 0, %s31
    %s32 = sphi 0, %s29
    %s33 = sphi 0, %s32
    %s49 = sphi 0, %s33
    %s57 = sphi 0, %s59
    %s60 = sphi 0, %s57
    %s61 = sphi 0, %s60
    %s77 = sphi 0, %s61
  $region4: #{channel_gate.3} parent=0 // loop_header_branch
    %10 = sbr.rel (%p8) target = $region8
  $region5: #{channel_gate.3} parent=0 // loop_body
    %s12 = ssub.s32 %s7, 1
    %s13 = ssub.s32 %s7, 2
    %s20 = sadd.s32 1, %s15
    %p21 = scmp.ge.s32.totalorder %s20, 1
    %s22 = scalar_select %p21, 0, %s20
    %s23 = sadd.s32 1, %s14
    %s24 = scalar_select %p21, %s23, %s14
    %p25 = scmp.ge.s32.totalorder %s24, 2
    %s26 = scalar_select %p25, 0, %s24
    %s27 = ssub.s32 %s14, %s26
    %p28 = scmp.eq.s32.totalorder %s27, 0
    %s30 = sadd.s32 %s29, 1
    %s31 = scalar_select %p28, %s29, %s30
    %p34 = pneg %p28
    %p35 = scmp.eq.s32.totalorder %s7, 1
    %p36 = por %p34, %p35
    %p37 = scmp.ne.s32.totalorder %s29, %s32
    %p38 = scmp.eq.s32.totalorder %s7, 0
    %p39 = por %p37, %p38
    %p40 = scmp.ne.s32.totalorder %s29, %s32
    %p41 = scmp.eq.s32.totalorder %s12, 1
    %p42 = por %p40, %p41
    %p43 = scmp.ne.s32.totalorder %s32, %s33
    %p44 = scmp.eq.s32.totalorder %s12, 0
    %p45 = por %p43, %p44
    %p46 = scmp.ne.s32.totalorder %s32, %s33
    %p47 = scmp.eq.s32.totalorder %s13, 1
    %p48 = por %p46, %p47
    %p50 = scmp.ne.s32.totalorder %s33, %s49
    %p51 = scmp.eq.s32.totalorder %s13, 0
    %p52 = por %p50, %p51
    %s53 = ssub.s32 %s14, %s26
    %s54 = ssub.s32 %s15, %s22
    %s55 = sor.u32 %s53, %s54
    %p56 = scmp.eq.s32.totalorder %s55, 0
    %s58 = sadd.s32 %s57, 1
    %s59 = scalar_select %p56, %s57, %s58
    %p62 = pneg %p56
    %p63 = scmp.eq.s32.totalorder %s7, 1
    %p64 = por %p62, %p63
    %p65 = scmp.ne.s32.totalorder %s57, %s60
    %p66 = scmp.eq.s32.totalorder %s7, 0
    %p67 = por %p65, %p66
    %p68 = scmp.ne.s32.totalorder %s57, %s60
    %p69 = scmp.eq.s32.totalorder %s12, 1
    %p70 = por %p68, %p69
    %p71 = scmp.ne.s32.totalorder %s60, %s61
    %p72 = scmp.eq.s32.totalorder %s12, 0
    %p73 = por %p71, %p72
    %p74 = scmp.ne.s32.totalorder %s60, %s61
    %p75 = scmp.eq.s32.totalorder %s13, 1
    %p76 = por %p74, %p75
    %p78 = scmp.ne.s32.totalorder %s61, %s77
    %p79 = scmp.eq.s32.totalorder %s13, 0
    %p80 = por %p78, %p79
    %p81 = scmp.le.s32.totalorder 1, %s7
    %p82 = scmp.lt.s32.totalorder %s7, 3
    %p83 = pnand %p81, %p82
    %p84 = pneg %p83
    // Predicated region
    $region9: #{channel_gate.3} parent=5 // pred_check
      _
    $region10: #{channel_gate.3} parent=5 // pred_check_branch
      %86 = sbr.rel (%p83) target = $region12
    $region11: #{channel_gate.3} parent=5 // pred_region
      %s87 = ssub.s32 %s7, 1
    $region12: #{channel_gate.3} parent=5 // pred_fallthru
      _
    %p88 = scmp.lt.s32.totalorder %s7, 2
    // Predicated region
    $region13: #{channel_gate.3} parent=5 // pred_check
      %p89 = pneg %p88
    $region14: #{channel_gate.3} parent=5 // pred_check_branch
      %91 = sbr.rel (%p89) target = $region16
    $region15: #{channel_gate.3} parent=5 // pred_region
      // Predicated region
      $region17: #{channel_gate.3} parent=15 // pred_check
        %p92 = pneg %p39
      $region18: #{channel_gate.3} parent=15 // pred_check_branch
        %94 = sbr.rel (%p92) target = $region20
      $region19: #{channel_gate.3} parent=15 // pred_region
        %p95 = scmp.lt.s32.totalorder %s14, 1
        %s96 = scalar_select %p95, %s14, 1
        %s97 = smul.addr %s96, 8
        %s98 = smul.addr %s97, 8
        %s99 = scalar_lea.vmem %s0, %s98
      $region20: #{channel_gate.3} parent=15 // pred_fallthru
        _
    $region16: #{channel_gate.3} parent=5 // pred_fallthru
      _
    %p100 = scmp.le.s32.totalorder 1, %s7
    %p101 = scmp.lt.s32.totalorder %s7, 3
    %p102 = pnand %p100, %p101
    %p103 = pneg %p102
    // Predicated region
    $region21: #{channel_gate.3} parent=5 // pred_check
      _
    $region22: #{channel_gate.3} parent=5 // pred_check_branch
      %105 = sbr.rel (%p102) target = $region24
    $region23: #{channel_gate.3} parent=5 // pred_region
      %s106 = ssub.s32 %s7, 1
      %p107 = scmp.lt.s32.totalorder %s16, 1
      %s108 = scalar_select %p107, %s16, 1
      %s109 = smul.addr %s108, 8
      %s110 = smul.addr %s109, 8
      %s111 = scalar_lea.vmem %s0, %s110
      %p112 = pneg %p45
      %p113 = pneg %p42
      %p114 = pneg %p73
      %p115 = pneg %p70
      %s116 = smul.u32 2, %s17
      %p117 = scmp.lt.s32.totalorder %s16, 1
      %s118 = scalar_select %p117, %s16, 1
      %p119 = scmp.lt.s32.totalorder %s116, 1
      %s120 = scalar_select %p119, %s116, 1
      %s121 = smul.addr %s118, 16
      %s122 = sadd.s32 %s120, %s121
      %s123 = smul.addr %s122, 8
      %s124 = scalar_lea.vmem %s1, %s123
      %p125 = scmp.lt.s32.totalorder %s16, 1
      %s126 = scalar_select %p125, %s16, 1
      %s127 = smul.addr %s126, 8
      %s128 = smul.addr %s127, 8
      %s129 = scalar_lea.vmem %s0, %s128
      %s130 = smul.u32 2, %s17
      %p131 = scmp.lt.s32.totalorder %s16, 1
      %s132 = scalar_select %p131, %s16, 1
      %p133 = scmp.lt.s32.totalorder %s130, 1
      %s134 = scalar_select %p133, %s130, 1
      %s135 = smul.addr %s132, 16
      %s136 = sadd.s32 %s134, %s135
      %s137 = smul.addr %s136, 8
      %s138 = scalar_lea.vmem %s1, %s137
      %s139 = smul.u32 2, %s17
      %v140 = vld [vmem:[%s129] sm:$0xff]
      %v141 = vld [vmem:[%s129 + $0x8] sm:$0xff]
      %v142 = vld [vmem:[%s129 + $0x10] sm:$0xff]
      %v143 = vld [vmem:[%s129 + $0x18] sm:$0xff]
      %v144 = vld [vmem:[%s129 + $0x20] sm:$0xff]
      %v145 = vld [vmem:[%s129 + $0x28] sm:$0xff]
      %v146 = vld [vmem:[%s129 + $0x30] sm:$0xff]
      %v147 = vld [vmem:[%s129 + $0x38] sm:$0xff]
      %149 = vset.pattern.permute.xlu0 0
      %150 = vperm.xlu0 %149, %v140
      %v151 = vpop.permute.xlu0 %150
      %154 = vset.pattern.permute.xlu0 0
      %155 = vperm.xlu0 %154, %v141
      %v156 = vpop.permute.xlu0 %155
      %159 = vset.pattern.permute.xlu0 0
      %160 = vperm.xlu0 %159, %v142
      %v161 = vpop.permute.xlu0 %160
      %164 = vset.pattern.permute.xlu0 0
      %165 = vperm.xlu0 %164, %v143
      %v166 = vpop.permute.xlu0 %165
      %169 = vset.pattern.permute.xlu0 0
      %170 = vperm.xlu0 %169, %v144
      %v171 = vpop.permute.xlu0 %170
      %174 = vset.pattern.permute.xlu0 0
      %175 = vperm.xlu0 %174, %v145
      %v176 = vpop.permute.xlu0 %175
      %179 = vset.pattern.permute.xlu0 0
      %180 = vperm.xlu0 %179, %v146
      %v181 = vpop.permute.xlu0 %180
      %184 = vset.pattern.permute.xlu0 0
      %185 = vperm.xlu0 %184, %v147
      %v186 = vpop.permute.xlu0 %185
      %188 = vst [vmem:[%s138] sm:$0xff] %v151
      %189 = vst [vmem:[%s138 + $0x8] sm:$0xff] %v151
      %190 = vst [vmem:[%s138 + $0x10] sm:$0xff] %v156
      %191 = vst [vmem:[%s138 + $0x18] sm:$0xff] %v156
      %192 = vst [vmem:[%s138 + $0x20] sm:$0xff] %v161
      %193 = vst [vmem:[%s138 + $0x28] sm:$0xff] %v161
      %194 = vst [vmem:[%s138 + $0x30] sm:$0xff] %v166
      %195 = vst [vmem:[%s138 + $0x38] sm:$0xff] %v166
      %196 = vst [vmem:[%s138 + $0x40] sm:$0xff] %v171
      %197 = vst [vmem:[%s138 + $0x48] sm:$0xff] %v171
      %198 = vst [vmem:[%s138 + $0x50] sm:$0xff] %v176
      %199 = vst [vmem:[%s138 + $0x58] sm:$0xff] %v176
      %200 = vst [vmem:[%s138 + $0x60] sm:$0xff] %v181
      %201 = vst [vmem:[%s138 + $0x68] sm:$0xff] %v181
      %202 = vst [vmem:[%s138 + $0x70] sm:$0xff] %v186
      %203 = vst [vmem:[%s138 + $0x78] sm:$0xff] %v186
      %s204 = smul.u32 2, %s17
      %p205 = scmp.lt.s32.totalorder %s16, 1
      %s206 = scalar_select %p205, %s16, 1
      %p207 = scmp.lt.s32.totalorder %s204, 1
      %s208 = scalar_select %p207, %s204, 1
      %s209 = smul.addr %s206, 16
      %s210 = sadd.s32 %s208, %s209
      %s211 = smul.addr %s210, 8
      %s212 = scalar_lea.vmem %s1, %s211
      // Predicated region
      $region25: #{channel_gate.3} parent=23 // pred_check
        %p213 = pneg %p70
      $region26: #{channel_gate.3} parent=23 // pred_check_branch
        %215 = sbr.rel (%p213) target = $region28
      $region27: #{channel_gate.3} parent=23 // pred_region
        %s216 = smul.u32 2, %s17
      $region28: #{channel_gate.3} parent=23 // pred_fallthru
        _
    $region24: #{channel_gate.3} parent=5 // pred_fallthru
      _
    %p217 = scmp.le.s32.totalorder 2, %s7
    // Predicated region
    $region29: #{channel_gate.3} parent=5 // pred_check
      %p218 = pneg %p217
    $region30: #{channel_gate.3} parent=5 // pred_check_branch
      %220 = sbr.rel (%p218) target = $region32
    $region31: #{channel_gate.3} parent=5 // pred_region
      %s221 = ssub.s32 %s7, 2
      // Predicated region
      $region33: #{channel_gate.3} parent=31 // pred_check
        %p222 = pneg %p76
      $region34: #{channel_gate.3} parent=31 // pred_check_branch
        %224 = sbr.rel (%p222) target = $region36
      $region35: #{channel_gate.3} parent=31 // pred_region
        %s225 = smul.u32 2, %s19
        %p226 = scmp.lt.s32.totalorder %s18, 1
        %s227 = scalar_select %p226, %s18, 1
        %p228 = scmp.lt.s32.totalorder %s225, 1
        %s229 = scalar_select %p228, %s225, 1
        %s230 = smul.addr %s227, 16
        %s231 = sadd.s32 %s229, %s230
        %s232 = smul.addr %s231, 8
        %s233 = scalar_lea.vmem %s1, %s232
      $region36: #{channel_gate.3} parent=31 // pred_fallthru
        _
    $region32: #{channel_gate.3} parent=5 // pred_fallthru
      _
  $region6: #{channel_gate.3} parent=0 // loop_footer
    %s11 = sadd.s32 1, %s7
  $region7: #{channel_gate.3} parent=0 // loop_footer_branch
    %6 = sbr.rel target = $region3
  $region8: #{channel_gate.3} parent=0 // loop_exit
    _

</llo_original>
